<compile_context>
chip_gen: v7x
topology: tpu7x:2x2x1
jax: 0.10.0
libtpu: 0.0.40
codegen_flags: <defaults>
</compile_context>

<pallas_src>
import math

import jax
import jax.numpy as jnp
from jax.experimental import pallas as pl
from jax.experimental.pallas import tpu as pltpu


def _mean_kernel(x_ref, w_ref, b_ref, mean_ref):
    # Hot path: matmul (MXU) + bias add (VPU) + tanh (EUP), all in-kernel.
    y = jnp.dot(x_ref[...], w_ref[...], preferred_element_type=jnp.float32)
    y = y + b_ref[...]                        # (TB, Out) + (1, Out) broadcast
    mean_ref[...] = jnp.tanh(y).astype(mean_ref.dtype)


def diag_gaussian_forward(x, w, b, logstd, *, batch_tile=512):
    """x: (B, In) f32; w: (In, Out) f32; b, logstd: (Out,) f32.

    Returns (action_mean, action_logstd), both (B, Out) f32 — the (mean,
    log_scale) pair that parameterizes FixedNormal.
    """
    B, In = x.shape
    Out = w.shape[1]
    b2 = b.reshape(1, Out)
    out_shape = jax.ShapeDtypeStruct((B, Out), jnp.float32)

    if B <= batch_tile:
        # Latency-bound regime: grid-free call, every operand fully resident
        # in VMEM; no pipeline prologue/epilogue, no per-step bookkeeping.
        mean = pl.pallas_call(
            _mean_kernel,
            out_shape=out_shape,
            in_specs=[
                pl.BlockSpec(memory_space=pltpu.MemorySpace.VMEM),
                pl.BlockSpec(memory_space=pltpu.MemorySpace.VMEM),
                pl.BlockSpec(memory_space=pltpu.MemorySpace.VMEM),
            ],
            out_specs=pl.BlockSpec(memory_space=pltpu.MemorySpace.VMEM),
        )(x, w, b2)
    else:
        # Throughput regime: tile the batch; weights/bias stay pinned in VMEM
        # across iterations (index_map -> block (0,0)); only x / mean stream.
        tb = batch_tile
        mean = pl.pallas_call(
            _mean_kernel,
            out_shape=out_shape,
            grid=(pl.cdiv(B, tb),),
            in_specs=[
                pl.BlockSpec((tb, In), lambda i: (i, 0)),
                pl.BlockSpec((In, Out), lambda i: (0, 0)),
                pl.BlockSpec((1, Out), lambda i: (0, 0)),
            ],
            out_specs=pl.BlockSpec((tb, Out), lambda i: (i, 0)),
            compiler_params=pltpu.CompilerParams(
                dimension_semantics=("parallel",)
            ),
        )(x, w, b2)

    # AddBias applied to zeros == broadcast of the logstd row; doing this in
    # the wrapper lets XLA keep it as a (free) broadcast instead of burning a
    # Pallas output buffer + HBM writeback on a constant.
    action_logstd = jnp.broadcast_to(logstd.reshape(1, Out), (B, Out))
    return mean, action_logstd


def fixed_normal_log_probs(mean, log_scale, actions):
    # Pure-JAX glue mirroring FixedNormal.log_probs (not the hot path).
    var = jnp.exp(log_scale * 2.0)
    log_prob = (
        -((actions - mean) ** 2) / (2.0 * var)
        - log_scale
        - math.log(math.sqrt(2.0 * math.pi))
    )
    return jnp.sum(log_prob, axis=-1, keepdims=True)


def fixed_normal_entropy(log_scale):
    # Pure-JAX glue mirroring FixedNormal.entropy.
    return jnp.sum(0.5 + 0.5 * math.log(2.0 * math.pi) + log_scale, axis=-1)


# TODO(synk): FixedNormal.sample (torch.normal) is stateful RNG glue, not a
# kernel; use jax.random.normal(key, mean.shape) * jnp.exp(log_scale) + mean.


if __name__ == "__main__":
    num_inputs, num_outputs, batch = 32, 8, 8

    key = jax.random.PRNGKey(0)
    k_w, k_b, k_x, k_x2 = jax.random.split(key, 4)

    # Deterministic init matching nn.Linear's default: U(-1/sqrt(in), 1/sqrt(in)).
    bound = 1.0 / math.sqrt(num_inputs)
    w = jax.random.uniform(
        k_w, (num_inputs, num_outputs), jnp.float32, -bound, bound
    )
    b = jax.random.uniform(k_b, (num_outputs,), jnp.float32, -bound, bound)
    logstd = jnp.zeros((num_outputs,), jnp.float32)  # AddBias init: zeros

    # --- small-batch (grid-free) path ---
    x = jax.random.normal(k_x, (batch, num_inputs), jnp.float32)
    mean, action_logstd = diag_gaussian_forward(x, w, b, logstd)
    jax.block_until_ready((mean, action_logstd))

    ref_mean = jnp.tanh(x @ w + b)
    ref_logstd = jnp.broadcast_to(logstd, ref_mean.shape)
    assert jnp.allclose(mean, ref_mean, atol=1e-5), "mean mismatch (small)"
    assert jnp.allclose(action_logstd, ref_logstd, atol=1e-6), "logstd mismatch"

    # --- large-batch (batch-tiled, 'parallel') path ---
    big_batch = 1024
    x_big = jax.random.normal(k_x2, (big_batch, num_inputs), jnp.float32)
    mean_big, logstd_big = diag_gaussian_forward(
        x_big, w, b, logstd, batch_tile=512
    )
    jax.block_until_ready((mean_big, logstd_big))
    ref_big = jnp.tanh(x_big @ w + b)
    assert jnp.allclose(mean_big, ref_big, atol=1e-5), "mean mismatch (tiled)"

    # Exercise the FixedNormal glue once too.
    actions = jax.random.normal(jax.random.PRNGKey(1), mean.shape, jnp.float32)
    lp = fixed_normal_log_probs(mean, action_logstd, actions)
    ent = fixed_normal_entropy(action_logstd)
    jax.block_until_ready((lp, ent))

    print("KERNEL_OK")
</pallas_src>

<mosaic_0001>
module attributes {stable_mosaic.version = 11 : i64} {
  func.func @_mean_kernel(%arg0: memref<8x32xf32, #tpu.memory_space<vmem>>, %arg1: memref<32x8xf32, #tpu.memory_space<vmem>>, %arg2: memref<1x8xf32, #tpu.memory_space<vmem>>, %arg3: memref<8x8xf32, #tpu.memory_space<vmem>>) attributes {dimension_semantics = [], scalar_prefetch = 0 : i64, scratch_operands = 0 : i64, tpu.core_type = #tpu.core_type<tc>} {
    %c0 = arith.constant 0 : index
    %c0_0 = arith.constant 0 : index
    %0 = vector.load %arg0[%c0, %c0_0] : memref<8x32xf32, #tpu.memory_space<vmem>>, vector<8x32xf32>
    %c0_1 = arith.constant 0 : index
    %c0_2 = arith.constant 0 : index
    %1 = vector.load %arg1[%c0_1, %c0_2] : memref<32x8xf32, #tpu.memory_space<vmem>>, vector<32x8xf32>
    %cst = arith.constant dense<0.000000e+00> : vector<8x8xf32>
    %2 = tpu.matmul %0, %1, %cst {dimension_numbers = #tpu.dot_dimension_numbers<[1], [0], [0], [1], [0, 0, 1, 1], [], []>} : vector<8x32xf32>, vector<32x8xf32>, vector<8x8xf32> -> vector<8x8xf32>
    %c0_3 = arith.constant 0 : index
    %c0_4 = arith.constant 0 : index
    %3 = vector.load %arg2[%c0_3, %c0_4] : memref<1x8xf32, #tpu.memory_space<vmem>>, vector<1x8xf32>
    %4 = vector.broadcast %3 : vector<1x8xf32> to vector<8x8xf32>
    %5 = arith.addf %2, %4 : vector<8x8xf32>
    %6 = math.tanh %5 : vector<8x8xf32>
    %c0_5 = arith.constant 0 : index
    %c0_6 = arith.constant 0 : index
    %7 = vector.load %arg3[%c0_5, %c0_6] : memref<8x8xf32, #tpu.memory_space<vmem>>, vector<8x8xf32>
    tpu.vector_store %arg3[%c0_5, %c0_6], %6 {strides = array<i32>} : memref<8x8xf32, #tpu.memory_space<vmem>>, vector<8x8xf32>,
    return
  }
}

</mosaic_0001>

<llo_original>
// kernel: tpu_custom_call.1
$region0: #{tpu_custom_call.1}
  #allocation0 [shape = 'u32[]', space=smem, size = 0x4, offset = 0x4, fixed_abs, tag = 'smem constant byte address 0x4 - core index']
  #allocation1 [shape = 'u32[144,128]{1,0:T(1,128)}', space=vmem, size = 0x12000, scoped, tag = 'internal scratch']
  %s0 = inlined_call_operand.vmem [shape: f32[8,32], index: 0, kind: input, shape index: {}]
  %s1 = inlined_call_operand.vmem [shape: f32[32,8], index: 1, kind: input, shape index: {}]
  %s2 = inlined_call_operand.vmem [shape: f32[1,8], index: 2, kind: input, shape index: {}]
  %s3 = inlined_call_operand.hbm [shape: f32[8,8], index: 3, kind: output, shape index: {}]
  %s4 = sld [smem:[#allocation0]]
  $region22: #{tpu_custom_call.1} parent=0
    _
  %s6 = ssub.s32 1, %s4
  %s7 = scalar_select 0, %s6, %s4
  $region1: #{tpu_custom_call.1} parent=0
    #allocation2 [shape = 'u8[4096]{0}', space=vmem, size = 0x1000, scoped, tag = 'output window, operand 0, single buffered']
    #allocation3 [shape = 's32[1]{0}', space=sflag, size = 0x4, scoped, tag = 'scoped memory for tpu_custom_call.1']
    %8 = vsyncpa [#allocation3], 0
    // Predicated region
    $region2: #{tpu_custom_call.1} parent=1 // pred_check
      _
    $region3: #{tpu_custom_call.1} parent=1 // pred_check_branch
      %10 = sbr.rel (0) target = $region5
    $region4: #{tpu_custom_call.1} parent=1 // pred_region
      _
    $region5: #{tpu_custom_call.1} parent=1 // pred_fallthru
      _
    // Predicated region
    $region6: #{tpu_custom_call.1} parent=1 // pred_check
      _
    $region7: #{tpu_custom_call.1} parent=1 // pred_check_branch
      %12 = sbr.rel (0) target = $region9
    $region8: #{tpu_custom_call.1} parent=1 // pred_region
      _
    $region9: #{tpu_custom_call.1} parent=1 // pred_fallthru
      _
    // Predicated region
    $region10: #{tpu_custom_call.1} parent=1 // pred_check
      _
    $region11: #{tpu_custom_call.1} parent=1 // pred_check_branch
      %14 = sbr.rel (0) target = $region13
    $region12: #{tpu_custom_call.1} parent=1 // pred_region
      _
    $region13: #{tpu_custom_call.1} parent=1 // pred_fallthru
      _
    %v15 = vld [vmem:[%s0] sm:$0xff]
    %v16 = vld [vmem:[%s1] sm:$0xff]
    %v17 = vld [vmem:[%s1 + $0x8] sm:$0xff]
    %v18 = vld [vmem:[%s1 + $0x10] sm:$0xff]
    %v19 = vld [vmem:[%s1 + $0x18] sm:$0xff]
    %v20 = vld [vmem:[%s2] sm:$0x1]
    %v22 = vlaneseq
    %v23 = vshrl.u32 %v22, 7
    %v24 = vsub.s32 0, %v23
    %v25 = vrot.slane %v20, %v24
    %vm27 = vcmask 261120
    %v29 = vsel %vm27, %v15, 0
    %31 = vmatprep.subr.mxu0 0.0
    %32 = vmatpush1.msra.mxu0 %v16
    %33 = vmatprep.subr.mxu0 0.0
    %34 = vmatpush1.msra.mxu0 %v17
    %35 = vmatprep.subr.mxu0 0.0
    %36 = vmatpush1.msra.mxu0 %v18
    %37 = vmatprep.subr.mxu0 0.0
    %38 = vmatpush1.msra.mxu0 %v19
    %39 = vmatprep.subr.mxu0 0.0
    %40 = vmatpush1.msra.mxu0 0.0
    %41 = vmatprep.subr.mxu0 0.0
    %42 = vmatpush1.msra.mxu0 0.0
    %43 = vmatprep.subr.mxu0 0.0
    %44 = vmatpush1.msra.mxu0 0.0
    %45 = vmatprep.subr.mxu0 0.0
    %46 = vmatpush1.msra.mxu0 0.0
    %47 = vmatprep.subr.mxu0 0.0
    %48 = vmatpush1.msra.mxu0 0.0
    %49 = vmatprep.subr.mxu0 0.0
    %50 = vmatpush1.msra.mxu0 0.0
    %51 = vmatprep.subr.mxu0 0.0
    %52 = vmatpush1.msra.mxu0 0.0
    %53 = vmatprep.subr.mxu0 0.0
    %54 = vmatpush1.msra.mxu0 0.0
    %55 = vmatprep.subr.mxu0 0.0
    %56 = vmatpush1.msra.mxu0 0.0
    %57 = vmatprep.subr.mxu0 0.0
    %58 = vmatpush1.msra.mxu0 0.0
    %59 = vmatprep.subr.mxu0 0.0
    %60 = vmatpush1.msra.mxu0 0.0
    %61 = vmatprep.subr.mxu0 0.0
    %62 = vmatpush1.msra.mxu0 0.0
    %63 = vmatprep.subr.mxu0 0.0
    %64 = vmatpush1.msra.mxu0 0.0
    %65 = vmatprep.subr.mxu0 0.0
    %66 = vmatpush1.msra.mxu0 0.0
    %67 = vmatprep.subr.mxu0 0.0
    %68 = vmatpush1.msra.mxu0 0.0
    %69 = vmatprep.subr.mxu0 0.0
    %70 = vmatpush1.msra.mxu0 0.0
    %71 = vmatprep.subr.mxu0 0.0
    %72 = vmatpush1.msra.mxu0 0.0
    %73 = vmatprep.subr.mxu0 0.0
    %74 = vmatpush1.msra.mxu0 0.0
    %75 = vmatprep.subr.mxu0 0.0
    %76 = vmatpush1.msra.mxu0 0.0
    %77 = vmatprep.subr.mxu0 0.0
    %78 = vmatpush1.msra.mxu0 0.0
    %79 = vmatprep.subr.mxu0 0.0
    %80 = vmatpush1.msra.mxu0 0.0
    %81 = vmatprep.subr.mxu0 0.0
    %82 = vmatpush1.msra.mxu0 0.0
    %83 = vmatprep.subr.mxu0 0.0
    %84 = vmatpush1.msra.mxu0 0.0
    %85 = vmatprep.subr.mxu0 0.0
    %86 = vmatpush1.msra.mxu0 0.0
    %87 = vmatprep.subr.mxu0 0.0
    %88 = vmatpush1.msra.mxu0 0.0
    %89 = vmatprep.subr.mxu0 0.0
    %90 = vmatpush1.msra.mxu0 0.0
    %91 = vmatprep.subr.mxu0 0.0
    %92 = vmatpush1.msra.mxu0 0.0
    %93 = vmatprep.subr.mxu0 0.0
    %94 = vmatpush1.msra.mxu0 0.0
    %95 = vmatprep.mubr.f32.mxu0 0.0
    %96 = vmatmul.mubr.f32.gmra.mrb[0].mxu0 %v29
    %v97 = vpop.f32.mrb[0].mxu0
    %v98 = vadd.f32 %v25, %v97
    %v99 = vpop.f32.mrb[0].mxu0
    %100 = vdwg.mxu0
    %v101 = vtanh.pop %v98
    %vm102 = vcmask 64512
    %103 = vst.msk [vmem:[#allocation2] sm:$0xff] %vm102, %v101
    // Predicated region
    $region14: #{tpu_custom_call.1} parent=1 // pred_check
      _
    $region15: #{tpu_custom_call.1} parent=1 // pred_check_branch
      %105 = sbr.rel (0) target = $region17
    $region16: #{tpu_custom_call.1} parent=1 // pred_region
      %s107 = ssub.s32 128, 128
      %108 = vsyncadd [#allocation3], %s107
      %s110 = sshll.u32 [#allocation2], 4
      %s111 = int_to_ptr.vmem [resolvable:$true] %s110
      %113 = dma.vmem_to_hbm [thread:$0]  %s111, 128, %s3, [#allocation3]
    $region17: #{tpu_custom_call.1} parent=1 // pred_fallthru
      _
    // Predicated region
    $region18: #{tpu_custom_call.1} parent=1 // pred_check
      _
    $region19: #{tpu_custom_call.1} parent=1 // pred_check_branch
      %115 = sbr.rel (0) target = $region21
    $region20: #{tpu_custom_call.1} parent=1 // pred_region
      %116 = dma.done [#allocation3], 128
    $region21: #{tpu_custom_call.1} parent=1 // pred_fallthru
      _
    %117 = vsyncpa [#allocation3], 1

</llo_original>
